<compile_context>
chip_gen: v6e
topology: v6e:2x2x1
jax: 0.10.0
libtpu: 0.0.40
codegen_flags: <defaults>
</compile_context>

<pallas_src>
import functools

import jax
import jax.numpy as jnp
from jax.experimental import pallas as pl
from jax.experimental.pallas import tpu as pltpu


def _sdpa_compute(q_ref, k_ref, v_ref, *, inv_temperature, mxu_dtype):
    """Shared body: refs are 2-D (batch squeezed): q (TQ,D), k (Lk,D), v (Lk,Dv)."""
    # Fold 1/temperature into q (TQ*D multiplies instead of TQ*Lk divides), then cast
    # MXU operands to bf16 (f32 accumulate).
    q = (q_ref[...] * inv_temperature).astype(mxu_dtype)
    k = k_ref[...].astype(mxu_dtype)

    # scores = q_scaled @ k^T as a last-axis contraction (no XLU transpose of k).
    scores = jax.lax.dot_general(
        q, k,
        dimension_numbers=(((1,), (1,)), ((), ())),
        preferred_element_type=jnp.float32,
    )

    # Numerically-stable softmax over the key axis (torch dim=2 == last axis here).
    m = jnp.max(scores, axis=-1, keepdims=True)
    e = jnp.exp(scores - m)
    denom = jnp.sum(e, axis=-1, keepdims=True)
    # Exact reciprocal on the (TQ,1) column (cheap: TQ divides) so returned attention
    # rows sum to 1, matching torch softmax.
    attn = e * (1.0 / denom)

    # output = dropout(attn) @ v   (dropout is identity in eval mode)
    out = jnp.dot(attn.astype(mxu_dtype), v_ref[...].astype(mxu_dtype),
                  preferred_element_type=jnp.float32)
    return attn, out


def _sdpa_kernel(q_ref, k_ref, v_ref, out_ref, attn_ref, *, inv_temperature, mxu_dtype):
    attn, out = _sdpa_compute(q_ref, k_ref, v_ref,
                              inv_temperature=inv_temperature, mxu_dtype=mxu_dtype)
    attn_ref[...] = attn.astype(attn_ref.dtype)
    out_ref[...] = out.astype(out_ref.dtype)


def _sdpa_kernel_no_attn(q_ref, k_ref, v_ref, out_ref, *, inv_temperature, mxu_dtype):
    _, out = _sdpa_compute(q_ref, k_ref, v_ref,
                           inv_temperature=inv_temperature, mxu_dtype=mxu_dtype)
    out_ref[...] = out.astype(out_ref.dtype)


def _vmem_capacity_bytes():
    """Physical VMEM of the current generation; conservative fallback if unknown."""
    try:
        return int(pltpu.get_tpu_info().vmem_capacity_bytes)
    except Exception:
        return 128 * 2**20      # v5e/v6e-sized default


def _vmem_estimate(tq, Lk, D, Dv, in_itemsize, attn_itemsize):
    """Per-step VMEM: double-buffered tiles + live f32 intermediates + bf16 MXU copies."""
    tiles = (tq * D + Lk * D + Lk * Dv + tq * Dv) * in_itemsize + tq * Lk * attn_itemsize
    live = 3 * tq * Lk * 4                              # scores / exp / attn (f32)
    live += (tq * D + Lk * D + Lk * Dv + tq * Lk) * 2   # bf16 MXU operand copies
    return 2 * tiles + live


def _choose_q_tile(Lq, Lk, D, Dv, in_itemsize, attn_itemsize, budget_bytes):
    """Largest Lq tile (multiple of 8 dividing Lq, or the full Lq) fitting the budget.

    Candidates are tried strictly largest-first; if nothing fits, the SMALLEST legal
    tile is returned (never silently the full extent).
    """
    cands = [t for t in (512, 256, 128, 64, 32, 16, 8) if t <= Lq and Lq % t == 0]
    if Lq not in cands:
        cands.append(Lq)          # full-extent exemption (e.g. Lq not a multiple of 8)
    cands = sorted(set(cands), reverse=True)
    for tq in cands:
        if _vmem_estimate(tq, Lk, D, Dv, in_itemsize, attn_itemsize) <= budget_bytes:
            return tq
    return cands[-1]


def scaled_dot_product_attention(q, k, v, temperature, *,
                                 attn_dtype=None,
                                 return_attn=True,
                                 mxu_dtype=jnp.bfloat16):
    """q: (B, Lq, D), k: (B, Lk, D), v: (B, Lk, Dv).

    Returns (output, attn) if return_attn else output.
    attn_dtype: dtype of the returned attention matrix (default: q.dtype; pass
      jnp.bfloat16 to halve the dominant (B,Lq,Lk) HBM writeback).
    mxu_dtype: operand dtype fed to the MXU (default bf16; pass jnp.float32 for
      bit-accurate-to-reference matmuls at ~3-4x lower MXU throughput).
    """
    B, Lq, D = q.shape
    Bk, Lk, Dk = k.shape
    Bv, Lv, Dv = v.shape
    assert D == Dk and Bk == B and Bv == B and Lv == Lk

    attn_dtype = q.dtype if attn_dtype is None else attn_dtype
    in_itemsize = jnp.dtype(q.dtype).itemsize
    attn_itemsize = jnp.dtype(attn_dtype).itemsize if return_attn else 0

    vmem_cap = _vmem_capacity_bytes()
    budget = int(0.45 * vmem_cap)             # ~28 MiB on v7x, ~57 MiB on v5e/v6e
    tq = _choose_q_tile(Lq, Lk, D, Dv, in_itemsize, attn_itemsize, budget)
    n_q = Lq // tq

    vmem_est = _vmem_estimate(tq, Lk, D, Dv, in_itemsize, attn_itemsize)
    # No double-hedging: the estimate already double-buffers; just add headroom and
    # stay well below physical VMEM of the current generation.
    vmem_limit = int(min(int(0.8 * vmem_cap), max(vmem_est + 4 * 2**20, 16 * 2**20)))

    inv_temperature = 1.0 / float(temperature)

    in_specs = [
        pl.BlockSpec((pl.Squeezed(), tq, D), lambda b, i: (b, i, 0)),
        pl.BlockSpec((pl.Squeezed(), Lk, D), lambda b, i: (b, 0, 0)),
        pl.BlockSpec((pl.Squeezed(), Lk, Dv), lambda b, i: (b, 0, 0)),
    ]
    out_spec_o = pl.BlockSpec((pl.Squeezed(), tq, Dv), lambda b, i: (b, i, 0))

    if return_attn:
        kernel = functools.partial(_sdpa_kernel, inv_temperature=inv_temperature,
                                   mxu_dtype=mxu_dtype)
        out_shape = (jax.ShapeDtypeStruct((B, Lq, Dv), q.dtype),
                     jax.ShapeDtypeStruct((B, Lq, Lk), attn_dtype))
        out_specs = [out_spec_o,
                     pl.BlockSpec((pl.Squeezed(), tq, Lk), lambda b, i: (b, i, 0))]
    else:
        kernel = functools.partial(_sdpa_kernel_no_attn, inv_temperature=inv_temperature,
                                   mxu_dtype=mxu_dtype)
        out_shape = jax.ShapeDtypeStruct((B, Lq, Dv), q.dtype)
        out_specs = out_spec_o

    # Grid: (batch, Lq tiles). Lq innermost so the K/V block index (b, 0, 0) is
    # unchanged between consecutive steps -> K/V stay VMEM-resident per batch.
    return pl.pallas_call(
        kernel,
        out_shape=out_shape,
        grid_spec=pltpu.PrefetchScalarGridSpec(
            num_scalar_prefetch=0,
            grid=(B, n_q),
            in_specs=in_specs,
            out_specs=out_specs,
        ),
        compiler_params=pltpu.CompilerParams(
            dimension_semantics=("parallel", "parallel"),
            vmem_limit_bytes=vmem_limit,
        ),
    )(q, k, v)


def _reference(q, k, v, temperature):
    attn = jnp.einsum("bqd,bkd->bqk", q, k) / temperature
    attn = jax.nn.softmax(attn, axis=2)
    out = jnp.einsum("bqk,bkd->bqd", attn, v)
    return out, attn


if __name__ == "__main__":
    key = jax.random.PRNGKey(0)
    kq, kk, kv = jax.random.split(key, 3)

    B, Lq, Lk, D, Dv = 2, 8, 8, 32, 32
    temperature = float(D) ** 0.5          # typical temperature = sqrt(d_k)

    q = jax.random.normal(kq, (B, Lq, D), dtype=jnp.float32)
    k = jax.random.normal(kk, (B, Lk, D), dtype=jnp.float32)
    v = jax.random.normal(kv, (B, Lk, Dv), dtype=jnp.float32)

    out, attn = scaled_dot_product_attention(q, k, v, temperature)
    out = jax.block_until_ready(out)
    attn = jax.block_until_ready(attn)

    # also exercise the attn-free variant (callers that discard attention)
    out_only = scaled_dot_product_attention(q, k, v, temperature, return_attn=False)
    out_only = jax.block_until_ready(out_only)

    # sanity check against the pure-JAX f32 reference; tolerances account for the
    # bf16 MXU operand path (pass mxu_dtype=jnp.float32 for tighter parity).
    ref_out, ref_attn = _reference(q, k, v, temperature)
    assert jnp.allclose(out, ref_out, atol=6e-2, rtol=6e-2)
    assert jnp.allclose(attn, ref_attn, atol=3e-2, rtol=3e-2)
    assert jnp.allclose(out_only, out, atol=1e-6, rtol=1e-6)
    # softmax rows sum to 1 (exact reciprocal path for the returned attention)
    assert jnp.allclose(jnp.sum(attn, axis=-1), jnp.ones((B, Lq)), atol=1e-3)

    print("KERNEL_OK")
</pallas_src>

<mosaic_0001>
module attributes {stable_mosaic.version = 11 : i64} {
  func.func @_sdpa_kernel(%arg0: i32, %arg1: i32, %arg2: memref<1x8x32xf32, #tpu.memory_space<vmem>>, %arg3: memref<1x8x32xf32, #tpu.memory_space<vmem>>, %arg4: memref<1x8x32xf32, #tpu.memory_space<vmem>>, %arg5: memref<1x8x32xf32, #tpu.memory_space<vmem>>, %arg6: memref<1x8x8xf32, #tpu.memory_space<vmem>>) attributes {dimension_semantics = [#tpu.dimension_semantics<parallel>, #tpu.dimension_semantics<parallel>], iteration_bounds = array<i64: 2, 1>, scalar_prefetch = 0 : i64, scratch_operands = 0 : i64, tpu.core_type = #tpu.core_type<tc>, window_params = [{transform_indices = @transform_0, window_bounds = array<i64: 1, 8, 32>}, {transform_indices = @transform_1, window_bounds = array<i64: 1, 8, 32>}, {transform_indices = @transform_2, window_bounds = array<i64: 1, 8, 32>}, {transform_indices = @transform_3, window_bounds = array<i64: 1, 8, 32>}, {transform_indices = @transform_4, window_bounds = array<i64: 1, 8, 8>}]} {
    %c0 = arith.constant 0 : index
    %c0_0 = arith.constant 0 : index
    %c0_1 = arith.constant 0 : index
    %0 = vector.load %arg2[%c0, %c0_0, %c0_1] : memref<1x8x32xf32, #tpu.memory_space<vmem>>, vector<1x8x32xf32>
    %1 = vector.shape_cast %0 : vector<1x8x32xf32> to vector<8x32xf32>
    %cst = arith.constant 0.176776692 : f32
    %2 = vector.broadcast %cst : f32 to vector<8x32xf32>
    %3 = arith.mulf %1, %2 : vector<8x32xf32>
    %4 = arith.truncf %3 : vector<8x32xf32> to vector<8x32xbf16>
    %c0_2 = arith.constant 0 : index
    %c0_3 = arith.constant 0 : index
    %c0_4 = arith.constant 0 : index
    %5 = vector.load %arg3[%c0_2, %c0_3, %c0_4] : memref<1x8x32xf32, #tpu.memory_space<vmem>>, vector<1x8x32xf32>
    %6 = vector.shape_cast %5 : vector<1x8x32xf32> to vector<8x32xf32>
    %7 = arith.truncf %6 : vector<8x32xf32> to vector<8x32xbf16>
    %cst_5 = arith.constant dense<0.000000e+00> : vector<8x8xf32>
    %8 = tpu.matmul %4, %7, %cst_5 {dimension_numbers = #tpu.dot_dimension_numbers<[1], [1], [0], [0], [0, 0, 1, 0], [], []>} : vector<8x32xbf16>, vector<8x32xbf16>, vector<8x8xf32> -> vector<8x8xf32>
    %cst_6 = arith.constant dense<0xFF800000> : vector<8xf32>
    %9 = vector.multi_reduction <maximumf>, %8, %cst_6 [1] : vector<8x8xf32> to vector<8xf32>
    %10 = vector.shape_cast %9 : vector<8xf32> to vector<8x1xf32>
    %11 = vector.broadcast %10 : vector<8x1xf32> to vector<8x8xf32>
    %12 = arith.subf %8, %11 : vector<8x8xf32>
    %13 = math.exp %12 : vector<8x8xf32>
    %cst_7 = arith.constant dense<0.000000e+00> : vector<8xf32>
    %14 = vector.multi_reduction <add>, %13, %cst_7 [1] : vector<8x8xf32> to vector<8xf32>
    %15 = vector.shape_cast %14 : vector<8xf32> to vector<8x1xf32>
    %cst_8 = arith.constant 1.000000e+00 : f32
    %16 = vector.broadcast %cst_8 : f32 to vector<8x1xf32>
    %17 = arith.divf %16, %15 : vector<8x1xf32>
    %18 = vector.broadcast %17 : vector<8x1xf32> to vector<8x8xf32>
    %19 = arith.mulf %13, %18 : vector<8x8xf32>
    %20 = arith.truncf %19 : vector<8x8xf32> to vector<8x8xbf16>
    %c0_9 = arith.constant 0 : index
    %c0_10 = arith.constant 0 : index
    %c0_11 = arith.constant 0 : index
    %21 = vector.load %arg4[%c0_9, %c0_10, %c0_11] : memref<1x8x32xf32, #tpu.memory_space<vmem>>, vector<1x8x32xf32>
    %22 = vector.shape_cast %21 : vector<1x8x32xf32> to vector<8x32xf32>
    %23 = arith.truncf %22 : vector<8x32xf32> to vector<8x32xbf16>
    %cst_12 = arith.constant dense<0.000000e+00> : vector<8x32xf32>
    %24 = tpu.matmul %20, %23, %cst_12 {dimension_numbers = #tpu.dot_dimension_numbers<[1], [0], [0], [1], [0, 0, 1, 1], [], []>} : vector<8x8xbf16>, vector<8x32xbf16>, vector<8x32xf32> -> vector<8x32xf32>
    %c0_13 = arith.constant 0 : index
    %c0_14 = arith.constant 0 : index
    %c0_15 = arith.constant 0 : index
    %25 = vector.load %arg6[%c0_13, %c0_14, %c0_15] : memref<1x8x8xf32, #tpu.memory_space<vmem>>, vector<1x8x8xf32>
    %26 = vector.shape_cast %25 : vector<1x8x8xf32> to vector<8x8xf32>
    %27 = vector.shape_cast %19 : vector<8x8xf32> to vector<1x8x8xf32>
    tpu.vector_store %arg6[%c0_13, %c0_14, %c0_15], %27 {strides = array<i32>} : memref<1x8x8xf32, #tpu.memory_space<vmem>>, vector<1x8x8xf32>,
    %c0_16 = arith.constant 0 : index
    %c0_17 = arith.constant 0 : index
    %c0_18 = arith.constant 0 : index
    %28 = vector.load %arg5[%c0_16, %c0_17, %c0_18] : memref<1x8x32xf32, #tpu.memory_space<vmem>>, vector<1x8x32xf32>
    %29 = vector.shape_cast %28 : vector<1x8x32xf32> to vector<8x32xf32>
    %30 = vector.shape_cast %24 : vector<8x32xf32> to vector<1x8x32xf32>
    tpu.vector_store %arg5[%c0_16, %c0_17, %c0_18], %30 {strides = array<i32>} : memref<1x8x32xf32, #tpu.memory_space<vmem>>, vector<1x8x32xf32>,
    return
  }
  func.func @transform_0(%arg0: i32, %arg1: i32) -> (i32, i32, i32) {
    %c0_i32 = arith.constant 0 : i32
    %c0_i32_0 = arith.constant 0 : i32
    return %arg0, %arg1, %c0_i32 : i32, i32, i32
  }
  func.func @transform_1(%arg0: i32, %arg1: i32) -> (i32, i32, i32) {
    %c0_i32 = arith.constant 0 : i32
    %c0_i32_0 = arith.constant 0 : i32
    %c0_i32_1 = arith.constant 0 : i32
    return %arg0, %c0_i32, %c0_i32_0 : i32, i32, i32
  }
  func.func @transform_2(%arg0: i32, %arg1: i32) -> (i32, i32, i32) {
    %c0_i32 = arith.constant 0 : i32
    %c0_i32_0 = arith.constant 0 : i32
    %c0_i32_1 = arith.constant 0 : i32
    return %arg0, %c0_i32, %c0_i32_0 : i32, i32, i32
  }
  func.func @transform_3(%arg0: i32, %arg1: i32) -> (i32, i32, i32) {
    %c0_i32 = arith.constant 0 : i32
    %c0_i32_0 = arith.constant 0 : i32
    return %arg0, %arg1, %c0_i32 : i32, i32, i32
  }
  func.func @transform_4(%arg0: i32, %arg1: i32) -> (i32, i32, i32) {
    %c0_i32 = arith.constant 0 : i32
    %c0_i32_0 = arith.constant 0 : i32
    return %arg0, %arg1, %c0_i32 : i32, i32, i32
  }
}

</mosaic_0001>

<llo_original>
// kernel: tpu_custom_call.1
$region0: #{tpu_custom_call.1}
  #allocation0 [shape = 'u32[]', space=smem, size = 0x4, offset = 0x4, fixed_abs, tag = 'smem constant byte address 0x4 - core index']
  #allocation1 [shape = 'u32[144,128]{1,0:T(1,128)}', space=vmem, size = 0x12000, scoped, tag = 'internal scratch']
  %s0 = inlined_call_operand.hbm [shape: f32[2,8,32], index: 0, kind: input, shape index: {}]
  %s1 = inlined_call_operand.hbm [shape: f32[2,8,32], index: 1, kind: input, shape index: {}]
  %s2 = inlined_call_operand.hbm [shape: f32[2,8,32], index: 2, kind: input, shape index: {}]
  %s3 = inlined_call_operand.hbm [shape: f32[2,8,32], index: 3, kind: output, shape index: {0}]
  %s4 = inlined_call_operand.hbm [shape: f32[2,8,8], index: 4, kind: output, shape index: {1}]
  %5 = xla_tuple %s3, %s4
  %s6 = sld [smem:[#allocation0]]
  $region65: #{tpu_custom_call.1} parent=0
    _
  %s8 = ssub.s32 1, %s6
  %s9 = scalar_select 0, %s8, %s6
  $region1: #{tpu_custom_call.1} parent=0
    #allocation2 [shape = 'u8[8192]{0}', space=vmem, size = 0x2000, scoped, tag = 'input window, operand 0']
    #allocation3 [shape = 's32[2]{0}', space=sflag, size = 0x8, scoped, tag = 'scoped memory for tpu_custom_call.1']
    #allocation4 [shape = 's32[2]{0}', space=sflag, size = 0x8, scoped, tag = 'scoped memory for tpu_custom_call.1']
    #allocation5 [shape = 'u8[8192]{0}', space=vmem, size = 0x2000, scoped, tag = 'input window, operand 1']
    #allocation6 [shape = 's32[2]{0}', space=sflag, size = 0x8, scoped, tag = 'scoped memory for tpu_custom_call.1']
    #allocation7 [shape = 'u8[8192]{0}', space=vmem, size = 0x2000, scoped, tag = 'input window, operand 2']
    #allocation8 [shape = 'u8[8192]{0}', space=vmem, size = 0x2000, scoped, tag = 'output window, operand 0']
    #allocation9 [shape = 'u8[8192]{0}', space=vmem, size = 0x2000, scoped, tag = 'output window, operand 1']
    #allocation10 [shape = 's32[2]{0}', space=sflag, size = 0x8, scoped, tag = 'scoped memory for tpu_custom_call.1']
    %10 = vsyncpa [#allocation3], 0
    %s11 = scalar_lea.sflag [#allocation3], 1
    %12 = vsyncpa %s11, 0
    %13 = vsyncpa [#allocation6], 0
    %s14 = scalar_lea.sflag [#allocation6], 1
    %15 = vsyncpa %s14, 0
    %16 = vsyncpa [#allocation4], 0
    %s17 = scalar_lea.sflag [#allocation4], 1
    %18 = vsyncpa %s17, 0
    %19 = vsyncpa [#allocation10], 0
    %s20 = scalar_lea.sflag [#allocation10], 1
    %21 = vsyncpa %s20, 0
    loop: start=0, step=1, limit=4
    $region2: #{tpu_custom_call.1} parent=1 // loop_pre_header
      _
    $region3: #{tpu_custom_call.1} parent=1 // loop_header
      %s23 = sphi 0, %s27
      %p24 = scmp.ge.s32.totalorder %s23, 4
      %s30 = sphi 0, %s42
      %s31 = sphi 0, %s38
      %s32 = sphi 0, %s30
      %s33 = sphi 0, %s31
      %s34 = sphi 0, %s32
      %s35 = sphi 0, %s33
      %s47 = sphi 0, %s49
      %s50 = sphi 0, %s47
      %s51 = sphi 0, %s50
      %s67 = sphi 0, %s51
      %s73 = sphi 0, %s75
      %s76 = sphi 0, %s73
      %s77 = sphi 0, %s76
      %s93 = sphi 0, %s77
      %s99 = sphi 0, %s101
      %s102 = sphi 0, %s99
      %s103 = sphi 0, %s102
      %s119 = sphi 0, %s103
      %s127 = sphi 0, %s129
      %s130 = sphi 0, %s127
      %s131 = sphi 0, %s130
      %s147 = sphi 0, %s131
      %s155 = sphi 0, %s157
      %s158 = sphi 0, %s155
      %s159 = sphi 0, %s158
      %s175 = sphi 0, %s159
    $region4: #{tpu_custom_call.1} parent=1 // loop_header_branch
      %26 = sbr.rel (%p24) target = $region8
    $region5: #{tpu_custom_call.1} parent=1 // loop_body
      %s28 = ssub.s32 %s23, 1
      %s29 = ssub.s32 %s23, 2
      %s36 = sadd.s32 1, %s31
      %p37 = scmp.ge.s32.totalorder %s36, 1
      %s38 = scalar_select %p37, 0, %s36
      %s39 = sadd.s32 1, %s30
      %s40 = scalar_select %p37, %s39, %s30
      %p41 = scmp.ge.s32.totalorder %s40, 2
      %s42 = scalar_select %p41, 0, %s40
      %s43 = ssub.s32 %s30, %s42
      %s44 = ssub.s32 %s31, %s38
      %s45 = sor.u32 %s43, %s44
      %p46 = scmp.eq.s32.totalorder %s45, 0
      %s48 = sadd.s32 %s47, 1
      %s49 = scalar_select %p46, %s47, %s48
      %p52 = pneg %p46
      %p53 = scmp.eq.s32.totalorder %s23, 1
      %p54 = por %p52, %p53
      %p55 = scmp.ne.s32.totalorder %s47, %s50
      %p56 = scmp.eq.s32.totalorder %s23, 0
      %p57 = por %p55, %p56
      %p58 = scmp.ne.s32.totalorder %s47, %s50
      %p59 = scmp.eq.s32.totalorder %s28, 1
      %p60 = por %p58, %p59
      %p61 = scmp.ne.s32.totalorder %s50, %s51
      %p62 = scmp.eq.s32.totalorder %s28, 0
      %p63 = por %p61, %p62
      %p64 = scmp.ne.s32.totalorder %s50, %s51
      %p65 = scmp.eq.s32.totalorder %s29, 1
      %p66 = por %p64, %p65
      %p68 = scmp.ne.s32.totalorder %s51, %s67
      %p69 = scmp.eq.s32.totalorder %s29, 0
      %p70 = por %p68, %p69
      %s71 = ssub.s32 %s30, %s42
      %p72 = scmp.eq.s32.totalorder %s71, 0
      %s74 = sadd.s32 %s73, 1
      %s75 = scalar_select %p72, %s73, %s74
      %p78 = pneg %p72
      %p79 = scmp.eq.s32.totalorder %s23, 1
      %p80 = por %p78, %p79
      %p81 = scmp.ne.s32.totalorder %s73, %s76
      %p82 = scmp.eq.s32.totalorder %s23, 0
      %p83 = por %p81, %p82
      %p84 = scmp.ne.s32.totalorder %s73, %s76
      %p85 = scmp.eq.s32.totalorder %s28, 1
      %p86 = por %p84, %p85
      %p87 = scmp.ne.s32.totalorder %s76, %s77
      %p88 = scmp.eq.s32.totalorder %s28, 0
      %p89 = por %p87, %p88
      %p90 = scmp.ne.s32.totalorder %s76, %s77
      %p91 = scmp.eq.s32.totalorder %s29, 1
      %p92 = por %p90, %p91
      %p94 = scmp.ne.s32.totalorder %s77, %s93
      %p95 = scmp.eq.s32.totalorder %s29, 0
      %p96 = por %p94, %p95
      %s97 = ssub.s32 %s30, %s42
      %p98 = scmp.eq.s32.totalorder %s97, 0
      %s100 = sadd.s32 %s99, 1
      %s101 = scalar_select %p98, %s99, %s100
      %p104 = pneg %p98
      %p105 = scmp.eq.s32.totalorder %s23, 1
      %p106 = por %p104, %p105
      %p107 = scmp.ne.s32.totalorder %s99, %s102
      %p108 = scmp.eq.s32.totalorder %s23, 0
      %p109 = por %p107, %p108
      %p110 = scmp.ne.s32.totalorder %s99, %s102
      %p111 = scmp.eq.s32.totalorder %s28, 1
      %p112 = por %p110, %p111
      %p113 = scmp.ne.s32.totalorder %s102, %s103
      %p114 = scmp.eq.s32.totalorder %s28, 0
      %p115 = por %p113, %p114
      %p116 = scmp.ne.s32.totalorder %s102, %s103
      %p117 = scmp.eq.s32.totalorder %s29, 1
      %p118 = por %p116, %p117
      %p120 = scmp.ne.s32.totalorder %s103, %s119
      %p121 = scmp.eq.s32.totalorder %s29, 0
      %p122 = por %p120, %p121
      %s123 = ssub.s32 %s30, %s42
      %s124 = ssub.s32 %s31, %s38
      %s125 = sor.u32 %s123, %s124
      %p126 = scmp.eq.s32.totalorder %s125, 0
      %s128 = sadd.s32 %s127, 1
      %s129 = scalar_select %p126, %s127, %s128
      %p132 = pneg %p126
      %p133 = scmp.eq.s32.totalorder %s23, 1
      %p134 = por %p132, %p133
      %p135 = scmp.ne.s32.totalorder %s127, %s130
      %p136 = scmp.eq.s32.totalorder %s23, 0
      %p137 = por %p135, %p136
      %p138 = scmp.ne.s32.totalorder %s127, %s130
      %p139 = scmp.eq.s32.totalorder %s28, 1
      %p140 = por %p138, %p139
      %p141 = scmp.ne.s32.totalorder %s130, %s131
      %p142 = scmp.eq.s32.totalorder %s28, 0
      %p143 = por %p141, %p142
      %p144 = scmp.ne.s32.totalorder %s130, %s131
      %p145 = scmp.eq.s32.totalorder %s29, 1
      %p146 = por %p144, %p145
      %p148 = scmp.ne.s32.totalorder %s131, %s147
      %p149 = scmp.eq.s32.totalorder %s29, 0
      %p150 = por %p148, %p149
      %s151 = ssub.s32 %s30, %s42
      %s152 = ssub.s32 %s31, %s38
      %s153 = sor.u32 %s151, %s152
      %p154 = scmp.eq.s32.totalorder %s153, 0
      %s156 = sadd.s32 %s155, 1
      %s157 = scalar_select %p154, %s155, %s156
      %p160 = pneg %p154
      %p161 = scmp.eq.s32.totalorder %s23, 1
      %p162 = por %p160, %p161
      %p163 = scmp.ne.s32.totalorder %s155, %s158
      %p164 = scmp.eq.s32.totalorder %s23, 0
      %p165 = por %p163, %p164
      %p166 = scmp.ne.s32.totalorder %s155, %s158
      %p167 = scmp.eq.s32.totalorder %s28, 1
      %p168 = por %p166, %p167
      %p169 = scmp.ne.s32.totalorder %s158, %s159
      %p170 = scmp.eq.s32.totalorder %s28, 0
      %p171 = por %p169, %p170
      %p172 = scmp.ne.s32.totalorder %s158, %s159
      %p173 = scmp.eq.s32.totalorder %s29, 1
      %p174 = por %p172, %p173
      %p176 = scmp.ne.s32.totalorder %s159, %s175
      %p177 = scmp.eq.s32.totalorder %s29, 0
      %p178 = por %p176, %p177
      %p179 = scmp.le.s32.totalorder 1, %s23
      %p180 = scmp.lt.s32.totalorder %s23, 3
      %p181 = pnand %p179, %p180
      %p182 = pneg %p181
      // Predicated region
      $region9: #{tpu_custom_call.1} parent=5 // pred_check
        _
      $region10: #{tpu_custom_call.1} parent=5 // pred_check_branch
        %184 = sbr.rel (%p181) target = $region12
      $region11: #{tpu_custom_call.1} parent=5 // pred_region
        %s185 = ssub.s32 %s23, 1
      $region12: #{tpu_custom_call.1} parent=5 // pred_fallthru
        _
      %p186 = scmp.lt.s32.totalorder %s23, 2
      // Predicated region
      $region13: #{tpu_custom_call.1} parent=5 // pred_check
        %p187 = pneg %p186
      $region14: #{tpu_custom_call.1} parent=5 // pred_check_branch
        %189 = sbr.rel (%p187) target = $region16
      $region15: #{tpu_custom_call.1} parent=5 // pred_region
        // Predicated region
        $region17: #{tpu_custom_call.1} parent=15 // pred_check
          %p190 = pneg %p57
        $region18: #{tpu_custom_call.1} parent=15 // pred_check_branch
          %192 = sbr.rel (%p190) target = $region20
        $region19: #{tpu_custom_call.1} parent=15 // pred_region
          %s193 = sand.u32 %s47, 1
          %s194 = scalar_lea.sflag [#allocation3], %s193
          %s195 = sand.u32 %s47, 1
          %s196 = smul.addr %s195, 8
          %s197 = scalar_lea.vmem [#allocation2], %s196
          %s199 = ssub.s32 128, 128
          %200 = vsyncadd %s194, %s199
          %s201 = sadd.s32 %s31, %s30
          %s202 = smul.addr %s201, 128
          %s203 = scalar_lea.hbm %s0, %s202
          %s205 = sshll.u32 %s197, 4
          %s206 = int_to_ptr.vmem [resolvable:$true] %s205
          %208 = dma.hbm_to_vmem [thread:$0]  %s203, 128, %s206, %s194
        $region20: #{tpu_custom_call.1} parent=15 // pred_fallthru
          _
        // Predicated region
        $region21: #{tpu_custom_call.1} parent=15 // pred_check
          %p209 = pneg %p83
        $region22: #{tpu_custom_call.1} parent=15 // pred_check_branch
          %211 = sbr.rel (%p209) target = $region24
        $region23: #{tpu_custom_call.1} parent=15 // pred_region
          %s212 = sand.u32 %s23, 1
          %s213 = scalar_lea.sflag [#allocation6], %s212
          %s214 = sand.u32 %s73, 1
          %s215 = smul.addr %s214, 8
          %s216 = scalar_lea.vmem [#allocation5], %s215
          %s218 = ssub.s32 128, 128
          %219 = vsyncadd %s213, %s218
          %s220 = smul.addr %s30, 128
          %s221 = scalar_lea.hbm %s1, %s220
          %s223 = sshll.u32 %s216, 4
          %s224 = int_to_ptr.vmem [resolvable:$true] %s223
          %226 = dma.hbm_to_vmem [thread:$0]  %s221, 128, %s224, %s213
        $region24: #{tpu_custom_call.1} parent=15 // pred_fallthru
          _
        // Predicated region
        $region25: #{tpu_custom_call.1} parent=15 // pred_check
          %p227 = pneg %p109
        $region26: #{tpu_custom_call.1} parent=15 // pred_check_branch
          %229 = sbr.rel (%p227) target = $region28
        $region27: #{tpu_custom_call.1} parent=15 // pred_region
          %s230 = sand.u32 %s23, 1
          %s231 = scalar_lea.sflag [#allocation6], %s230
          %s232 = sand.u32 %s99, 1
          %s233 = smul.addr %s232, 8
          %s234 = scalar_lea.vmem [#allocation7], %s233
          %s236 = ssub.s32 128, 128
          %237 = vsyncadd %s231, %s236
          %s238 = smul.addr %s30, 128
          %s239 = scalar_lea.hbm %s2, %s238
          %s241 = sshll.u32 %s234, 4
          %s242 = int_to_ptr.vmem [resolvable:$true] %s241
          %244 = dma.hbm_to_vmem [thread:$0]  %s239, 128, %s242, %s231
        $region28: #{tpu_custom_call.1} parent=15 // pred_fallthru
          _
      $region16: #{tpu_custom_call.1} parent=5 // pred_fallthru
        _
      %p245 = scmp.le.s32.totalorder 1, %s23
      %p246 = scmp.lt.s32.totalorder %s23, 3
      %p247 = pnand %p245, %p246
      %p248 = pneg %p247
      // Predicated region
      $region29: #{tpu_custom_call.1} parent=5 // pred_check
        _
      $region30: #{tpu_custom_call.1} parent=5 // pred_check_branch
        %250 = sbr.rel (%p247) target = $region32
      $region31: #{tpu_custom_call.1} parent=5 // pred_region
        %s251 = ssub.s32 %s23, 1
        %s252 = sand.u32 %s50, 1
        %s253 = scalar_lea.sflag [#allocation3], %s252
        %s254 = sand.u32 %s50, 1
        %s255 = smul.addr %s254, 8
        %s256 = scalar_lea.vmem [#allocation2], %s255
        // Predicated region
        $region33: #{tpu_custom_call.1} parent=31 // pred_check
          %p257 = pneg %p63
        $region34: #{tpu_custom_call.1} parent=31 // pred_check_branch
          %259 = sbr.rel (%p257) target = $region36
        $region35: #{tpu_custom_call.1} parent=31 // pred_region
          %260 = dma.done %s253, 128
        $region36: #{tpu_custom_call.1} parent=31 // pred_fallthru
          _
        %s261 = sand.u32 %s28, 1
        %s262 = scalar_lea.sflag [#allocation6], %s261
        %s263 = sand.u32 %s76, 1
        %s264 = smul.addr %s263, 8
        %s265 = scalar_lea.vmem [#allocation5], %s264
        // Predicated region
        $region37: #{tpu_custom_call.1} parent=31 // pred_check
          %p266 = pneg %p89
        $region38: #{tpu_custom_call.1} parent=31 // pred_check_branch
          %268 = sbr.rel (%p266) target = $region40
        $region39: #{tpu_custom_call.1} parent=31 // pred_region
          %269 = dma.done %s262, 128
        $region40: #{tpu_custom_call.1} parent=31 // pred_fallthru
          _
        %s270 = sand.u32 %s28, 1
        %s271 = scalar_lea.sflag [#allocation6], %s270
        %s272 = sand.u32 %s102, 1
        %s273 = smul.addr %s272, 8
        %s274 = scalar_lea.vmem [#allocation7], %s273
        // Predicated region
        $region41: #{tpu_custom_call.1} parent=31 // pred_check
          %p275 = pneg %p115
        $region42: #{tpu_custom_call.1} parent=31 // pred_check_branch
          %277 = sbr.rel (%p275) target = $region44
        $region43: #{tpu_custom_call.1} parent=31 // pred_region
          %278 = dma.done %s271, 128
        $region44: #{tpu_custom_call.1} parent=31 // pred_fallthru
          _
        %s279 = sand.u32 %s50, 1
        %s280 = scalar_lea.sflag [#allocation3], %s279
        %s281 = sand.u32 %s50, 1
        %s282 = smul.addr %s281, 8
        %s283 = scalar_lea.vmem [#allocation2], %s282
        %p284 = pneg %p63
        %p285 = pneg %p60
        %s286 = sand.u32 %s28, 1
        %s287 = scalar_lea.sflag [#allocation6], %s286
        %s288 = sand.u32 %s76, 1
        %s289 = smul.addr %s288, 8
        %s290 = scalar_lea.vmem [#allocation5], %s289
        %p291 = pneg %p89
        %p292 = pneg %p86
        %s293 = sand.u32 %s28, 1
        %s294 = scalar_lea.sflag [#allocation6], %s293
        %s295 = sand.u32 %s102, 1
        %s296 = smul.addr %s295, 8
        %s297 = scalar_lea.vmem [#allocation7], %s296
        %p298 = pneg %p115
        %p299 = pneg %p112
        %p300 = pneg %p143
        %p301 = pneg %p140
        %s302 = sand.u32 %s130, 1
        %s303 = scalar_lea.sflag [#allocation4], %s302
        %s304 = sand.u32 %s130, 1
        %s305 = smul.addr %s304, 8
        %s306 = scalar_lea.vmem [#allocation8], %s305
        %p307 = pneg %p171
        %p308 = pneg %p168
        %s309 = sand.u32 %s158, 1
        %s310 = scalar_lea.sflag [#allocation10], %s309
        %s311 = sand.u32 %s158, 1
        %s312 = smul.addr %s311, 8
        %s313 = scalar_lea.vmem [#allocation9], %s312
        %v315 = vld [vmem:[%s256] sm:$0xff]
        %v316 = vmul.f32 %v315, 0.17677669
        %v317 = vpack.c.bf16 %v316, %v316
        %v318 = vld [vmem:[%s265] sm:$0xff]
        %v319 = vpack.c.bf16 %v318, %v318
        %vm320 = vcmask 261120
        %v322 = vsel %vm320, %v317, 0
        %v325 = vsel %vm320, %v319, 0
        %327 = vmatprep.subr.bf16.mxu0 0
        %328 = vmatpush1.bf16.xpose.msra.mxu0 0
        %329 = vmatprep.subr.bf16.mxu0 0
        %330 = vmatpush1.bf16.xpose.msra.mxu0 0
        %331 = vmatprep.subr.bf16.mxu0 0
        %332 = vmatpush1.bf16.xpose.msra.mxu0 0
        %333 = vmatprep.subr.bf16.mxu0 0
        %334 = vmatpush1.bf16.xpose.msra.mxu0 0
        %335 = vmatprep.subr.bf16.mxu0 0
        %336 = vmatpush1.bf16.xpose.msra.mxu0 0
        %337 = vmatprep.subr.bf16.mxu0 0
        %338 = vmatpush1.bf16.xpose.msra.mxu0 0
        %339 = vmatprep.subr.bf16.mxu0 0
        %340 = vmatpush1.bf16.xpose.msra.mxu0 0
        %341 = vmatprep.subr.bf16.mxu0 0
        %342 = vmatpush1.bf16.xpose.msra.mxu0 %v325
        %343 = vmatprep.subr.bf16.mxu0 0
        %344 = vmatpush2.bf16.xpose.msra.mxu0 0
        %345 = vmatprep.subr.bf16.mxu0 0
        %346 = vmatpush2.bf16.xpose.msra.mxu0 0
        %347 = vmatprep.subr.bf16.mxu0 0
        %348 = vmatpush2.bf16.xpose.msra.mxu0 0
        %349 = vmatprep.subr.bf16.mxu0 0
        %350 = vmatpush2.bf16.xpose.msra.mxu0 0
        %351 = vmatprep.subr.bf16.mxu0 0
        %352 = vmatpush2.bf16.xpose.msra.mxu0 0
        %353 = vmatprep.subr.bf16.mxu0 0
        %354 = vmatpush2.bf16.xpose.msra.mxu0 0
        %355 = vmatprep.subr.bf16.mxu0 0
        %356 = vmatpush2.bf16.xpose.msra.mxu0 0
        %357 = vmatprep.subr.bf16.mxu0 0
        %358 = vmatpush2.bf16.xpose.msra.mxu0 0
        %359 = vmatprep.mubr.bf16.mxu0 0
        %360 = vmatmul.mubr.bf16.gmra.mxu0 %v322
        %v361 = vpop.f32.mrf.mxu0
        %v362 = vadd.f32 0.0, %v361
        %v363 = vpop.f32.mrf.mxu0
        %v364 = vpop.f32.mrf.mxu0
        %v365 = vpop.f32.mrf.mxu0
        %366 = vdwg.mxu0
        %vm367 = vcmask 64512
        %v368 = vsel %vm367, %v362, -inf
        %369 = vmax.xlane.f32.xlu0 %v368
        %v370 = vpop.xlane.xlu0 %369
        %v371 = vsub.f32 %v362, %v370
        %v372 = vmul.f32 %v371, 1.442695
        %v373 = vpow.pop %v372
        %v374 = vsel %vm367, %v373, 0.0
        %375 = vadd.xlane.f32.xlu0 %v374
        %v376 = vpop.xlane.xlu0 %375
        %v377 = vrcp.pop %v376
        %v378 = vmul.f32 1.0, %v377
        %v379 = vmul.f32 %v373, %v378
        %v380 = vpack.c.bf16 %v379, %v379
        %v381 = vld [vmem:[%s274] sm:$0xff]
        %v382 = vpack.c.bf16 %v381, %v381
        %v384 = vsel %vm367, %v380, 0
        %vm386 = vcmask 1043456
        %v388 = vsel %vm386, %v382, 0
        %390 = vmatprep.subr.bf16.mxu0 0
        %391 = vmatpush1.bf16.msra.mxu0 0
        %392 = vmatprep.subr.bf16.mxu0 0
        %393 = vmatpush1.bf16.msra.mxu0 0
        %394 = vmatprep.subr.bf16.mxu0 0
        %395 = vmatpush1.bf16.msra.mxu0 0
        %396 = vmatprep.subr.bf16.mxu0 0
        %397 = vmatpush1.bf16.msra.mxu0 0
        %398 = vmatprep.subr.bf16.mxu0 0
        %399 = vmatpush1.bf16.msra.mxu0 0
        %400 = vmatprep.subr.bf16.mxu0 0
        %401 = vmatpush1.bf16.msra.mxu0 0
        %402 = vmatprep.subr.bf16.mxu0 0
        %403 = vmatpush1.bf16.msra.mxu0 0
        %404 = vmatprep.subr.bf16.mxu0 0
        %405 = vmatpush1.bf16.msra.mxu0 %v388
        %406 = vmatprep.subr.bf16.mxu0 0
        %407 = vmatpush2.bf16.msra.mxu0 0
        %408 = vmatprep.subr.bf16.mxu0 0
        %409 = vmatpush2.bf16.msra.mxu0 0
        %410 = vmatprep.subr.bf16.mxu0 0
        %411 = vmatpush2.bf16.msra.mxu0 0
        %412 = vmatprep.subr.bf16.mxu0 0
        %413 = vmatpush2.bf16.msra.mxu0 0
        %414 = vmatprep.subr.bf16.mxu0 0
        %415 = vmatpush2.bf16.msra.mxu0 0
        %416 = vmatprep.subr.bf16.mxu0 0
        %417 = vmatpush2.bf16.msra.mxu0 0
        %418 = vmatprep.subr.bf16.mxu0 0
        %419 = vmatpush2.bf16.msra.mxu0 0
        %420 = vmatprep.subr.bf16.mxu0 0
        %421 = vmatpush2.bf16.msra.mxu0 0
        %422 = vmatprep.mubr.bf16.mxu0 0
        %423 = vmatmul.mubr.bf16.gmra.mxu0 %v384
        %v424 = vpop.f32.mrf.mxu0
        %v425 = vadd.f32 0.0, %v424
        %v426 = vpop.f32.mrf.mxu0
        %v427 = vpop.f32.mrf.mxu0
        %v428 = vpop.f32.mrf.mxu0
        %429 = vdwg.mxu0
        %430 = vst.msk [vmem:[%s313] sm:$0xff] %vm367, %v379
        %431 = vst.msk [vmem:[%s306] sm:$0xff] %vm320, %v425
        %s432 = sand.u32 %s130, 1
        %s433 = scalar_lea.sflag [#allocation4], %s432
        %s434 = sand.u32 %s130, 1
        %s435 = smul.addr %s434, 8
        %s436 = scalar_lea.vmem [#allocation8], %s435
        %s437 = sand.u32 %s158, 1
        %s438 = scalar_lea.sflag [#allocation10], %s437
        %s439 = sand.u32 %s158, 1
        %s440 = smul.addr %s439, 8
        %s441 = scalar_lea.vmem [#allocation9], %s440
        // Predicated region
        $region45: #{tpu_custom_call.1} parent=31 // pred_check
          %p442 = pneg %p140
        $region46: #{tpu_custom_call.1} parent=31 // pred_check_branch
          %444 = sbr.rel (%p442) target = $region48
        $region47: #{tpu_custom_call.1} parent=31 // pred_region
          %s446 = ssub.s32 128, 128
          %447 = vsyncadd %s433, %s446
          %s448 = sadd.s32 %s33, %s32
          %s449 = smul.addr %s448, 128
          %s450 = scalar_lea.hbm %s3, %s449
          %s452 = sshll.u32 %s436, 4
          %s453 = int_to_ptr.vmem [resolvable:$true] %s452
          %455 = dma.vmem_to_hbm [thread:$0]  %s453, 128, %s450, %s433
        $region48: #{tpu_custom_call.1} parent=31 // pred_fallthru
          _
        // Predicated region
        $region49: #{tpu_custom_call.1} parent=31 // pred_check
          %p456 = pneg %p168
        $region50: #{tpu_custom_call.1} parent=31 // pred_check_branch
          %458 = sbr.rel (%p456) target = $region52
        $region51: #{tpu_custom_call.1} parent=31 // pred_region
          %s460 = ssub.s32 128, 128
          %461 = vsyncadd %s438, %s460
          %s462 = sadd.s32 %s33, %s32
          %s463 = smul.addr %s462, 128
          %s464 = scalar_lea.hbm %s4, %s463
          %s466 = sshll.u32 %s441, 4
          %s467 = int_to_ptr.vmem [resolvable:$true] %s466
          %469 = dma.vmem_to_hbm [thread:$0]  %s467, 128, %s464, %s438
        $region52: #{tpu_custom_call.1} parent=31 // pred_fallthru
          _
      $region32: #{tpu_custom_call.1} parent=5 // pred_fallthru
        _
      %p470 = scmp.le.s32.totalorder 2, %s23
      // Predicated region
      $region53: #{tpu_custom_call.1} parent=5 // pred_check
        %p471 = pneg %p470
      $region54: #{tpu_custom_call.1} parent=5 // pred_check_branch
        %473 = sbr.rel (%p471) target = $region56
      $region55: #{tpu_custom_call.1} parent=5 // pred_region
        %s474 = ssub.s32 %s23, 2
        // Predicated region
        $region57: #{tpu_custom_call.1} parent=55 // pred_check
          %p475 = pneg %p146
        $region58: #{tpu_custom_call.1} parent=55 // pred_check_branch
          %477 = sbr.rel (%p475) target = $region60
        $region59: #{tpu_custom_call.1} parent=55 // pred_region
          %s478 = sand.u32 %s131, 1
          %s479 = scalar_lea.sflag [#allocation4], %s478
          %s480 = sand.u32 %s131, 1
          %s481 = smul.addr %s480, 8
          %s482 = scalar_lea.vmem [#allocation8], %s481
          %483 = dma.done %s479, 128
        $region60: #{tpu_custom_call.1} parent=55 // pred_fallthru
          _
        // Predicated region
        $region61: #{tpu_custom_call.1} parent=55 // pred_check
          %p484 = pneg %p174
        $region62: #{tpu_custom_call.1} parent=55 // pred_check_branch
          %486 = sbr.rel (%p484) target = $region64
        $region63: #{tpu_custom_call.1} parent=55 // pred_region
          %s487 = sand.u32 %s159, 1
          %s488 = scalar_lea.sflag [#allocation10], %s487
          %s489 = sand.u32 %s159, 1
          %s490 = smul.addr %s489, 8
          %s491 = scalar_lea.vmem [#allocation9], %s490
          %492 = dma.done %s488, 128
        $region64: #{tpu_custom_call.1} parent=55 // pred_fallthru
          _
      $region56: #{tpu_custom_call.1} parent=5 // pred_fallthru
        _
    $region6: #{tpu_custom_call.1} parent=1 // loop_footer
      %s27 = sadd.s32 1, %s23
    $region7: #{tpu_custom_call.1} parent=1 // loop_footer_branch
      %22 = sbr.rel target = $region3
    $region8: #{tpu_custom_call.1} parent=1 // loop_exit
      _
    %493 = vsyncpa [#allocation3], 1
    %s494 = scalar_lea.sflag [#allocation3], 1
    %495 = vsyncpa %s494, 1
    %496 = vsyncpa [#allocation6], 1
    %s497 = scalar_lea.sflag [#allocation6], 1
    %498 = vsyncpa %s497, 1
    %499 = vsyncpa [#allocation4], 1
    %s500 = scalar_lea.sflag [#allocation4], 1
    %501 = vsyncpa %s500, 1
    %502 = vsyncpa [#allocation10], 1
    %s503 = scalar_lea.sflag [#allocation10], 1
    %504 = vsyncpa %s503, 1

</llo_original>
